<compile_context>
chip_gen: v7x
topology: tpu7x:2x2x1
jax: 0.10.0
libtpu: 0.0.40
codegen_flags: <defaults>
</compile_context>

<pallas_src>
import functools

import jax
import jax.numpy as jnp
from jax.experimental import pallas as pl
from jax.experimental.pallas import tpu as pltpu


def _temporal_block_kernel(x_ref, w_ref, b_ref, o_ref, *,
                           nb, ksize, dilation, stride, tl, single_l_tile):
    """One grid step: nb batch elements x one lane tile of the output.

    x_ref: (nb, C_in, L_pad)      zero-padded input chunk (compute dtype)
    w_ref: (K, C_out_pad, C_in)   per-tap conv weights (compute dtype), resident
    b_ref: (C_out_pad, 1)         conv bias (f32), resident
    o_ref: (nb, C_out_pad, tl)    lane-dense output tile
    """
    if single_l_tile:
        base = 0                     # Python int -> purely static slices below
    else:
        # tl*stride is a multiple of 128, so tell Mosaic the tile base is
        # lane-aligned; only the static k*dilation offset needs a lane shift.
        base = pl.multiple_of(pl.program_id(1) * (tl * stride), 128)

    bias = b_ref[...]                              # hoisted (f32)
    w = [w_ref[kk] for kk in range(ksize)]         # hoisted tiny weight loads

    for bb in range(nb):
        acc = None
        for kk in range(ksize):
            start = base + kk * dilation
            if stride == 1:                        # common TCN case
                xs = x_ref[bb, :, pl.ds(start, tl)]
            else:                                  # strided lane read
                xs = x_ref[bb, :, pl.ds(start, tl, stride=stride)]
            part = jnp.dot(w[kk], xs, preferred_element_type=jnp.float32)
            acc = part if acc is None else acc + part
        acc = jnp.maximum(acc + bias, 0.0)         # bias + ReLU (f32); dropout = id
        o_ref[bb] = acc.astype(o_ref.dtype)        # full-tile lane-dense store


def temporal_block_forward(x, weight, bias, *, stride, padding, dilation,
                           compute_dtype=None, max_lane_tile=2048):
    """x: (N, C_in, L); weight: (C_out, C_in, K); bias: (C_out,).

    compute_dtype: dtype fed to the MXU (jnp.bfloat16 recommended on v6e/v7x;
    keep f32 on v5e for small channel counts).  Accumulation is always f32.
    """
    n, c_in, l = x.shape
    c_out, c_in_w, ksize = weight.shape
    assert c_in == c_in_w
    assert stride >= 1 and dilation >= 1 and padding >= 0
    l_out = (l + 2 * padding - dilation * (ksize - 1) - 1) // stride + 1
    assert l_out > 0
    out_dtype = x.dtype
    if compute_dtype is None:
        compute_dtype = x.dtype     # f32 default (best choice on v5e)

    # Sublane-aligned output channel count (8 for 32-bit, 16 for 16-bit out).
    sub = 8 if jnp.dtype(out_dtype).itemsize >= 4 else 16
    c_out_pad = -(-c_out // sub) * sub

    # ---- generation-aware VMEM budget ------------------------------------
    try:
        vmem_cap = int(pltpu.get_tpu_info().vmem_capacity_bytes)
    except Exception:
        vmem_cap = 64 * 1024 * 1024          # v7x worst case if query fails
    vmem_limit = min(int(vmem_cap * 0.75), 100 * 1024 * 1024)
    budget = int(vmem_limit * 0.6)           # headroom for pipeline/compiler

    in_isz = jnp.dtype(compute_dtype).itemsize
    out_isz = jnp.dtype(out_dtype).itemsize

    # ---- lane (time) tile -------------------------------------------------
    lp_min = -(-l_out // 128) * 128
    tl = min(lp_min, max(128, (max_lane_tile // 128) * 128))
    # If N==1 and there would be a single L tile, split L so both v7x
    # TensorCores get a parallel step.
    if n * (-(-lp_min // tl)) < 2 and lp_min >= 256:
        tl = max(128, ((-(-lp_min // 2)) // 128) * 128)

    # ---- batch chunk, bounded by the VMEM budget --------------------------
    nb = min(n, 8)

    def _fits(nb_, tl_):
        n_lt = -(-lp_min // tl_)
        lp_tot = n_lt * tl_
        l_pad_ = max(l + 2 * padding,
                     (lp_tot - 1) * stride + dilation * (ksize - 1) + 1)
        in_b = 2 * nb_ * c_in * l_pad_ * in_isz          # double-buffered input
        out_b = 2 * nb_ * c_out_pad * tl_ * out_isz      # double-buffered output
        w_b = 2 * ksize * c_out_pad * c_in * in_isz + 2 * c_out_pad * 4
        return in_b + out_b + w_b <= budget

    while nb > 1 and not _fits(nb, tl):
        nb = max(1, nb // 2)
    while tl > 128 and not _fits(nb, tl):
        tl = max(128, tl // 2)

    n_l_tiles = -(-lp_min // tl)
    lp_total = n_l_tiles * tl
    # Keep >= 2 parallel grid steps when N >= 2 (megacore / v7x two TCs).
    if n >= 2 and (-(-n // nb)) * n_l_tiles < 2:
        nb = -(-n // 2)
    n_chunks = -(-n // nb)
    n_pad = n_chunks * nb

    # ---- host-side padding / casts (done once, tiny HBM cost) -------------
    # Padded input covers the conv halo AND the junk lane-tail columns so all
    # in-kernel reads are in bounds; junk output columns/rows are sliced off.
    l_pad = max(l + 2 * padding,
                (lp_total - 1) * stride + dilation * (ksize - 1) + 1)
    x_p = jnp.pad(x.astype(compute_dtype),
                  ((0, n_pad - n), (0, 0), (padding, l_pad - l - padding)))

    # Per-tap weights (K, C_out_pad, C_in), output channels zero-padded.
    w_taps = jnp.transpose(weight, (2, 0, 1))
    w_taps = jnp.pad(w_taps, ((0, 0), (0, c_out_pad - c_out), (0, 0)))
    w_taps = w_taps.astype(compute_dtype)
    bias2d = jnp.pad(bias, (0, c_out_pad - c_out)).reshape(c_out_pad, 1)
    bias2d = bias2d.astype(jnp.float32)

    kernel = functools.partial(
        _temporal_block_kernel,
        nb=nb, ksize=ksize, dilation=dilation, stride=stride, tl=tl,
        single_l_tile=(n_l_tiles == 1))

    out = pl.pallas_call(
        kernel,
        out_shape=jax.ShapeDtypeStruct((n_pad, c_out_pad, lp_total), out_dtype),
        grid_spec=pltpu.PrefetchScalarGridSpec(
            num_scalar_prefetch=0,
            grid=(n_chunks, n_l_tiles),
            in_specs=[
                # Input chunk: resident across the inner L-tile axis.
                pl.BlockSpec((nb, c_in, l_pad), lambda b, j: (b, 0, 0)),
                # Weights / bias: constant index maps -> VMEM resident.
                pl.BlockSpec((ksize, c_out_pad, c_in), lambda b, j: (0, 0, 0)),
                pl.BlockSpec((c_out_pad, 1), lambda b, j: (0, 0)),
            ],
            out_specs=pl.BlockSpec((nb, c_out_pad, tl), lambda b, j: (b, 0, j)),
        ),
        compiler_params=pltpu.CompilerParams(
            dimension_semantics=("parallel", "parallel"),
            vmem_limit_bytes=vmem_limit),
    )(x_p, w_taps, bias2d)

    # No transpose/reshape needed: just slice the padding off.
    return out[:n, :c_out, :l_out]


def _reference_forward(x, weight, bias, *, stride, padding, dilation):
    # Pure-JAX reference (lax conv), NCW layout, for correctness check.
    out = jax.lax.conv_general_dilated(
        x, weight,
        window_strides=(stride,),
        padding=[(padding, padding)],
        rhs_dilation=(dilation,),
        dimension_numbers=("NCH", "OIH", "NCH"),
        precision=jax.lax.Precision.HIGHEST)
    out = out + bias[None, :, None]
    return jnp.maximum(out, 0.0)


if __name__ == "__main__":
    # Shapes consistent with TemporalBlock(n_inputs=4, n_outputs=8,
    # kernel_size=3, stride=1, padding=2, dilation=2).
    N, C_IN, L = 2, 4, 16
    C_OUT, K = 8, 3
    STRIDE, PADDING, DILATION = 1, 2, 2

    key = jax.random.PRNGKey(0)
    kx, kw, kb = jax.random.split(key, 3)

    x = jax.random.normal(kx, (N, C_IN, L), dtype=jnp.float32)
    # init_weights(): conv1.weight ~ N(0, 0.01); bias: deterministic synthetic.
    weight = 0.01 * jax.random.normal(kw, (C_OUT, C_IN, K), dtype=jnp.float32)
    bias = 0.1 * jax.random.normal(kb, (C_OUT,), dtype=jnp.float32)

    ref = _reference_forward(x, weight, bias, stride=STRIDE, padding=PADDING,
                             dilation=DILATION)

    # 1) f32 MXU path (tight check).
    out = jax.block_until_ready(temporal_block_forward(
        x, weight, bias, stride=STRIDE, padding=PADDING, dilation=DILATION))
    assert out.shape == ref.shape, (out.shape, ref.shape)
    assert jnp.allclose(out, ref, atol=1e-5, rtol=1e-5), \
        float(jnp.max(jnp.abs(out - ref)))

    # 2) bf16 MXU path (f32 accumulation), loose tolerance.
    out_bf16 = jax.block_until_ready(temporal_block_forward(
        x, weight, bias, stride=STRIDE, padding=PADDING, dilation=DILATION,
        compute_dtype=jnp.bfloat16))
    assert out_bf16.shape == ref.shape
    assert jnp.allclose(out_bf16.astype(jnp.float32), ref,
                        atol=5e-2, rtol=5e-2), \
        float(jnp.max(jnp.abs(out_bf16.astype(jnp.float32) - ref)))

    # 3) Multi-L-tile path (dynamic lane-tile base), longer sequence.
    N2, L2 = 3, 300
    x2 = jax.random.normal(kx, (N2, C_IN, L2), dtype=jnp.float32)
    ref2 = _reference_forward(x2, weight, bias, stride=STRIDE, padding=PADDING,
                              dilation=DILATION)
    out2 = jax.block_until_ready(temporal_block_forward(
        x2, weight, bias, stride=STRIDE, padding=PADDING, dilation=DILATION,
        max_lane_tile=128))
    assert out2.shape == ref2.shape, (out2.shape, ref2.shape)
    assert jnp.allclose(out2, ref2, atol=1e-5, rtol=1e-5), \
        float(jnp.max(jnp.abs(out2 - ref2)))

    # 4) Batch-padding path (N=3 -> 2 chunks of nb=2, one padded row).
    x3 = jax.random.normal(kb, (3, C_IN, L), dtype=jnp.float32)
    ref3 = _reference_forward(x3, weight, bias, stride=STRIDE, padding=PADDING,
                              dilation=DILATION)
    out3 = jax.block_until_ready(temporal_block_forward(
        x3, weight, bias, stride=STRIDE, padding=PADDING, dilation=DILATION))
    assert out3.shape == ref3.shape
    assert jnp.allclose(out3, ref3, atol=1e-5, rtol=1e-5)

    print("KERNEL_OK")
</pallas_src>

<mosaic_0001>
module attributes {stable_mosaic.version = 11 : i64} {
  func.func @_temporal_block_kernel(%arg0: i32, %arg1: i32, %arg2: memref<1x4x132xf32, #tpu.memory_space<vmem>>, %arg3: memref<3x8x4xf32, #tpu.memory_space<vmem>>, %arg4: memref<8x1xf32, #tpu.memory_space<vmem>>, %arg5: memref<1x8x128xf32, #tpu.memory_space<vmem>>) attributes {dimension_semantics = [#tpu.dimension_semantics<parallel>, #tpu.dimension_semantics<parallel>], iteration_bounds = array<i64: 2, 1>, scalar_prefetch = 0 : i64, scratch_operands = 0 : i64, tpu.core_type = #tpu.core_type<tc>, window_params = [{transform_indices = @transform_0, window_bounds = array<i64: 1, 4, 132>}, {pipeline_mode = #tpu.pipeline_mode<synchronous>, transform_indices = @transform_1, window_bounds = array<i64: 3, 8, 4>}, {pipeline_mode = #tpu.pipeline_mode<synchronous>, transform_indices = @transform_2, window_bounds = array<i64: 8, 1>}, {transform_indices = @transform_3, window_bounds = array<i64: 1, 8, 128>}]} {
    %c0 = arith.constant 0 : index
    %c0_0 = arith.constant 0 : index
    %0 = vector.load %arg4[%c0, %c0_0] : memref<8x1xf32, #tpu.memory_space<vmem>>, vector<8x1xf32>
    %c0_1 = arith.constant 0 : index
    %c0_2 = arith.constant 0 : index
    %c0_3 = arith.constant 0 : index
    %1 = vector.load %arg3[%c0_1, %c0_2, %c0_3] : memref<3x8x4xf32, #tpu.memory_space<vmem>>, vector<1x8x4xf32>
    %2 = vector.shape_cast %1 : vector<1x8x4xf32> to vector<8x4xf32>
    %c1 = arith.constant 1 : index
    %c0_4 = arith.constant 0 : index
    %c0_5 = arith.constant 0 : index
    %3 = vector.load %arg3[%c1, %c0_4, %c0_5] : memref<3x8x4xf32, #tpu.memory_space<vmem>>, vector<1x8x4xf32>
    %4 = vector.shape_cast %3 : vector<1x8x4xf32> to vector<8x4xf32>
    %c2 = arith.constant 2 : index
    %c0_6 = arith.constant 0 : index
    %c0_7 = arith.constant 0 : index
    %5 = vector.load %arg3[%c2, %c0_6, %c0_7] : memref<3x8x4xf32, #tpu.memory_space<vmem>>, vector<1x8x4xf32>
    %6 = vector.shape_cast %5 : vector<1x8x4xf32> to vector<8x4xf32>
    %c0_8 = arith.constant 0 : index
    %c0_9 = arith.constant 0 : index
    %c0_10 = arith.constant 0 : index
    %7 = vector.load %arg2[%c0_8, %c0_9, %c0_10] : memref<1x4x132xf32, #tpu.memory_space<vmem>>, vector<1x4x128xf32>
    %8 = vector.shape_cast %7 : vector<1x4x128xf32> to vector<4x128xf32>
    %cst = arith.constant dense<0.000000e+00> : vector<8x128xf32>
    %9 = tpu.matmul %2, %8, %cst {dimension_numbers = #tpu.dot_dimension_numbers<[1], [0], [0], [1], [0, 0, 1, 1], [], []>} : vector<8x4xf32>, vector<4x128xf32>, vector<8x128xf32> -> vector<8x128xf32>
    %c0_11 = arith.constant 0 : index
    %c0_12 = arith.constant 0 : index
    %c2_13 = arith.constant 2 : index
    %10 = vector.load %arg2[%c0_11, %c0_12, %c2_13] : memref<1x4x132xf32, #tpu.memory_space<vmem>>, vector<1x4x128xf32>
    %11 = vector.shape_cast %10 : vector<1x4x128xf32> to vector<4x128xf32>
    %cst_14 = arith.constant dense<0.000000e+00> : vector<8x128xf32>
    %12 = tpu.matmul %4, %11, %cst_14 {dimension_numbers = #tpu.dot_dimension_numbers<[1], [0], [0], [1], [0, 0, 1, 1], [], []>} : vector<8x4xf32>, vector<4x128xf32>, vector<8x128xf32> -> vector<8x128xf32>
    %13 = arith.addf %9, %12 : vector<8x128xf32>
    %c0_15 = arith.constant 0 : index
    %c0_16 = arith.constant 0 : index
    %c4 = arith.constant 4 : index
    %14 = vector.load %arg2[%c0_15, %c0_16, %c4] : memref<1x4x132xf32, #tpu.memory_space<vmem>>, vector<1x4x128xf32>
    %15 = vector.shape_cast %14 : vector<1x4x128xf32> to vector<4x128xf32>
    %cst_17 = arith.constant dense<0.000000e+00> : vector<8x128xf32>
    %16 = tpu.matmul %6, %15, %cst_17 {dimension_numbers = #tpu.dot_dimension_numbers<[1], [0], [0], [1], [0, 0, 1, 1], [], []>} : vector<8x4xf32>, vector<4x128xf32>, vector<8x128xf32> -> vector<8x128xf32>
    %17 = arith.addf %13, %16 : vector<8x128xf32>
    %18 = vector.broadcast %0 : vector<8x1xf32> to vector<8x128xf32>
    %19 = arith.addf %17, %18 : vector<8x128xf32>
    %cst_18 = arith.constant 0.000000e+00 : f32
    %20 = vector.broadcast %cst_18 : f32 to vector<8x128xf32>
    %21 = arith.maximumf %19, %20 : vector<8x128xf32>
    %c0_19 = arith.constant 0 : index
    %c0_20 = arith.constant 0 : index
    %c0_21 = arith.constant 0 : index
    %22 = vector.load %arg5[%c0_19, %c0_20, %c0_21] : memref<1x8x128xf32, #tpu.memory_space<vmem>>, vector<1x8x128xf32>
    %23 = vector.shape_cast %22 : vector<1x8x128xf32> to vector<8x128xf32>
    %24 = vector.shape_cast %21 : vector<8x128xf32> to vector<1x8x128xf32>
    tpu.vector_store %arg5[%c0_19, %c0_20, %c0_21], %24 {strides = array<i32>} : memref<1x8x128xf32, #tpu.memory_space<vmem>>, vector<1x8x128xf32>,
    return
  }
  func.func @transform_0(%arg0: i32, %arg1: i32) -> (i32, i32, i32) {
    %c0_i32 = arith.constant 0 : i32
    %c0_i32_0 = arith.constant 0 : i32
    %c0_i32_1 = arith.constant 0 : i32
    return %arg0, %c0_i32, %c0_i32_0 : i32, i32, i32
  }
  func.func @transform_1(%arg0: i32, %arg1: i32) -> (i32, i32, i32) {
    %c0_i32 = arith.constant 0 : i32
    %c0_i32_0 = arith.constant 0 : i32
    %c0_i32_1 = arith.constant 0 : i32
    %c0_i32_2 = arith.constant 0 : i32
    return %c0_i32, %c0_i32_0, %c0_i32_1 : i32, i32, i32
  }
  func.func @transform_2(%arg0: i32, %arg1: i32) -> (i32, i32) {
    %c0_i32 = arith.constant 0 : i32
    %c0_i32_0 = arith.constant 0 : i32
    %c0_i32_1 = arith.constant 0 : i32
    return %c0_i32, %c0_i32_0 : i32, i32
  }
  func.func @transform_3(%arg0: i32, %arg1: i32) -> (i32, i32, i32) {
    %c0_i32 = arith.constant 0 : i32
    %c0_i32_0 = arith.constant 0 : i32
    return %arg0, %c0_i32, %arg1 : i32, i32, i32
  }
}

</mosaic_0001>

<llo_original>
// kernel: tpu_custom_call.1
$region0: #{tpu_custom_call.1}
  #allocation0 [shape = 'u32[]', space=smem, size = 0x4, offset = 0x4, fixed_abs, tag = 'smem constant byte address 0x4 - core index']
  #allocation1 [shape = 'u32[144,128]{1,0:T(1,128)}', space=vmem, size = 0x12000, scoped, tag = 'internal scratch']
  %s0 = inlined_call_operand.vmem [shape: f32[2,4,132], index: 0, kind: input, shape index: {}]
  %s1 = inlined_call_operand.vmem [shape: f32[3,8,4], index: 1, kind: input, shape index: {}]
  %s2 = inlined_call_operand.vmem [shape: f32[8,1], index: 2, kind: input, shape index: {}]
  %s3 = inlined_call_operand.hbm [shape: f32[2,8,128], index: 3, kind: output, shape index: {}]
  %s4 = sld [smem:[#allocation0]]
  $region45: #{tpu_custom_call.1} parent=0
    _
  %s6 = ssub.s32 1, %s4
  %s7 = scalar_select 0, %s6, %s4
  $region1: #{tpu_custom_call.1} parent=0
    #allocation2 [shape = 'u8[8192]{0}', space=vmem, size = 0x2000, scoped, tag = 'output window, operand 0']
    #allocation3 [shape = 's32[2]{0}', space=sflag, size = 0x8, scoped, tag = 'scoped memory for tpu_custom_call.1']
    %8 = vsyncpa [#allocation3], 0
    %s9 = scalar_lea.sflag [#allocation3], 1
    %10 = vsyncpa %s9, 0
    loop: start=0, step=1, limit=4
    $region2: #{tpu_custom_call.1} parent=1 // loop_pre_header
      _
    $region3: #{tpu_custom_call.1} parent=1 // loop_header
      %s12 = sphi 0, %s16
      %p13 = scmp.ge.s32.totalorder %s12, 4
      %s19 = sphi 0, %s31
      %s20 = sphi 0, %s27
      %s21 = sphi 0, %s19
      %s22 = sphi 0, %s20
      %s23 = sphi 0, %s21
      %s24 = sphi 0, %s22
      %s34 = sphi 0, %s36
      %s37 = sphi 0, %s34
      %s38 = sphi 0, %s37
      %s54 = sphi 0, %s38
      %s58 = sphi 0, %s58
      %s60 = sphi 0, %s58
      %s61 = sphi 0, %s60
      %s75 = sphi 0, %s61
      %s79 = sphi 0, %s79
      %s81 = sphi 0, %s79
      %s82 = sphi 0, %s81
      %s96 = sphi 0, %s82
      %s104 = sphi 0, %s106
      %s107 = sphi 0, %s104
      %s108 = sphi 0, %s107
      %s124 = sphi 0, %s108
    $region4: #{tpu_custom_call.1} parent=1 // loop_header_branch
      %15 = sbr.rel (%p13) target = $region8
    $region5: #{tpu_custom_call.1} parent=1 // loop_body
      %s17 = ssub.s32 %s12, 1
      %s18 = ssub.s32 %s12, 2
      %s25 = sadd.s32 1, %s20
      %p26 = scmp.ge.s32.totalorder %s25, 1
      %s27 = scalar_select %p26, 0, %s25
      %s28 = sadd.s32 1, %s19
      %s29 = scalar_select %p26, %s28, %s19
      %p30 = scmp.ge.s32.totalorder %s29, 2
      %s31 = scalar_select %p30, 0, %s29
      %s32 = ssub.s32 %s19, %s31
      %p33 = scmp.eq.s32.totalorder %s32, 0
      %s35 = sadd.s32 %s34, 1
      %s36 = scalar_select %p33, %s34, %s35
      %p39 = pneg %p33
      %p40 = scmp.eq.s32.totalorder %s12, 1
      %p41 = por %p39, %p40
      %p42 = scmp.ne.s32.totalorder %s34, %s37
      %p43 = scmp.eq.s32.totalorder %s12, 0
      %p44 = por %p42, %p43
      %p45 = scmp.ne.s32.totalorder %s34, %s37
      %p46 = scmp.eq.s32.totalorder %s17, 1
      %p47 = por %p45, %p46
      %p48 = scmp.ne.s32.totalorder %s37, %s38
      %p49 = scmp.eq.s32.totalorder %s17, 0
      %p50 = por %p48, %p49
      %p51 = scmp.ne.s32.totalorder %s37, %s38
      %p52 = scmp.eq.s32.totalorder %s18, 1
      %p53 = por %p51, %p52
      %p55 = scmp.ne.s32.totalorder %s38, %s54
      %p56 = scmp.eq.s32.totalorder %s18, 0
      %p57 = por %p55, %p56
      %s59 = sadd.s32 %s58, 1
      %p62 = scmp.eq.s32.totalorder %s12, 1
      %p63 = scmp.ne.s32.totalorder %s58, %s60
      %p64 = scmp.eq.s32.totalorder %s12, 0
      %p65 = por %p63, %p64
      %p66 = scmp.ne.s32.totalorder %s58, %s60
      %p67 = scmp.eq.s32.totalorder %s17, 1
      %p68 = por %p66, %p67
      %p69 = scmp.ne.s32.totalorder %s60, %s61
      %p70 = scmp.eq.s32.totalorder %s17, 0
      %p71 = por %p69, %p70
      %p72 = scmp.ne.s32.totalorder %s60, %s61
      %p73 = scmp.eq.s32.totalorder %s18, 1
      %p74 = por %p72, %p73
      %p76 = scmp.ne.s32.totalorder %s61, %s75
      %p77 = scmp.eq.s32.totalorder %s18, 0
      %p78 = por %p76, %p77
      %s80 = sadd.s32 %s79, 1
      %p83 = scmp.eq.s32.totalorder %s12, 1
      %p84 = scmp.ne.s32.totalorder %s79, %s81
      %p85 = scmp.eq.s32.totalorder %s12, 0
      %p86 = por %p84, %p85
      %p87 = scmp.ne.s32.totalorder %s79, %s81
      %p88 = scmp.eq.s32.totalorder %s17, 1
      %p89 = por %p87, %p88
      %p90 = scmp.ne.s32.totalorder %s81, %s82
      %p91 = scmp.eq.s32.totalorder %s17, 0
      %p92 = por %p90, %p91
      %p93 = scmp.ne.s32.totalorder %s81, %s82
      %p94 = scmp.eq.s32.totalorder %s18, 1
      %p95 = por %p93, %p94
      %p97 = scmp.ne.s32.totalorder %s82, %s96
      %p98 = scmp.eq.s32.totalorder %s18, 0
      %p99 = por %p97, %p98
      %s100 = ssub.s32 %s19, %s31
      %s101 = ssub.s32 %s20, %s27
      %s102 = sor.u32 %s100, %s101
      %p103 = scmp.eq.s32.totalorder %s102, 0
      %s105 = sadd.s32 %s104, 1
      %s106 = scalar_select %p103, %s104, %s105
      %p109 = pneg %p103
      %p110 = scmp.eq.s32.totalorder %s12, 1
      %p111 = por %p109, %p110
      %p112 = scmp.ne.s32.totalorder %s104, %s107
      %p113 = scmp.eq.s32.totalorder %s12, 0
      %p114 = por %p112, %p113
      %p115 = scmp.ne.s32.totalorder %s104, %s107
      %p116 = scmp.eq.s32.totalorder %s17, 1
      %p117 = por %p115, %p116
      %p118 = scmp.ne.s32.totalorder %s107, %s108
      %p119 = scmp.eq.s32.totalorder %s17, 0
      %p120 = por %p118, %p119
      %p121 = scmp.ne.s32.totalorder %s107, %s108
      %p122 = scmp.eq.s32.totalorder %s18, 1
      %p123 = por %p121, %p122
      %p125 = scmp.ne.s32.totalorder %s108, %s124
      %p126 = scmp.eq.s32.totalorder %s18, 0
      %p127 = por %p125, %p126
      %p128 = scmp.le.s32.totalorder 1, %s12
      %p129 = scmp.lt.s32.totalorder %s12, 3
      %p130 = pnand %p128, %p129
      %p131 = pneg %p130
      // Predicated region
      $region9: #{tpu_custom_call.1} parent=5 // pred_check
        _
      $region10: #{tpu_custom_call.1} parent=5 // pred_check_branch
        %133 = sbr.rel (%p130) target = $region12
      $region11: #{tpu_custom_call.1} parent=5 // pred_region
        %s134 = ssub.s32 %s12, 1
        // Predicated region
        $region13: #{tpu_custom_call.1} parent=11 // pred_check
          %p135 = pneg %p71
        $region14: #{tpu_custom_call.1} parent=11 // pred_check_branch
          %137 = sbr.rel (%p135) target = $region16
        $region15: #{tpu_custom_call.1} parent=11 // pred_region
          _
        $region16: #{tpu_custom_call.1} parent=11 // pred_fallthru
          _
        // Predicated region
        $region17: #{tpu_custom_call.1} parent=11 // pred_check
          %p138 = pneg %p92
        $region18: #{tpu_custom_call.1} parent=11 // pred_check_branch
          %140 = sbr.rel (%p138) target = $region20
        $region19: #{tpu_custom_call.1} parent=11 // pred_region
          _
        $region20: #{tpu_custom_call.1} parent=11 // pred_fallthru
          _
      $region12: #{tpu_custom_call.1} parent=5 // pred_fallthru
        _
      %p141 = scmp.lt.s32.totalorder %s12, 2
      // Predicated region
      $region21: #{tpu_custom_call.1} parent=5 // pred_check
        %p142 = pneg %p141
      $region22: #{tpu_custom_call.1} parent=5 // pred_check_branch
        %144 = sbr.rel (%p142) target = $region24
      $region23: #{tpu_custom_call.1} parent=5 // pred_region
        // Predicated region
        $region25: #{tpu_custom_call.1} parent=23 // pred_check
          %p145 = pneg %p44
        $region26: #{tpu_custom_call.1} parent=23 // pred_check_branch
          %147 = sbr.rel (%p145) target = $region28
        $region27: #{tpu_custom_call.1} parent=23 // pred_region
          %p148 = scmp.lt.s32.totalorder %s19, 1
          %s149 = scalar_select %p148, %s19, 1
          %s150 = smul.addr %s149, 2
          %s151 = smul.addr %s150, 4
          %s152 = scalar_lea.vmem %s0, %s151
        $region28: #{tpu_custom_call.1} parent=23 // pred_fallthru
          _
      $region24: #{tpu_custom_call.1} parent=5 // pred_fallthru
        _
      %p153 = scmp.le.s32.totalorder 1, %s12
      %p154 = scmp.lt.s32.totalorder %s12, 3
      %p155 = pnand %p153, %p154
      %p156 = pneg %p155
      // Predicated region
      $region29: #{tpu_custom_call.1} parent=5 // pred_check
        _
      $region30: #{tpu_custom_call.1} parent=5 // pred_check_branch
        %158 = sbr.rel (%p155) target = $region32
      $region31: #{tpu_custom_call.1} parent=5 // pred_region
        %s159 = ssub.s32 %s12, 1
        %p160 = scmp.lt.s32.totalorder %s21, 1
        %s161 = scalar_select %p160, %s21, 1
        %s162 = smul.addr %s161, 2
        %s163 = smul.addr %s162, 4
        %s164 = scalar_lea.vmem %s0, %s163
        %p165 = pneg %p50
        %p166 = pneg %p47
        %p167 = pneg %p71
        %p168 = pneg %p68
        %p169 = pneg %p92
        %p170 = pneg %p89
        %p171 = pneg %p120
        %p172 = pneg %p117
        %s173 = sand.u32 %s107, 1
        %s174 = scalar_lea.sflag [#allocation3], %s173
        %s175 = sand.u32 %s107, 1
        %s176 = smul.addr %s175, 8
        %s177 = scalar_lea.vmem [#allocation2], %s176
        %p178 = scmp.lt.s32.totalorder %s21, 1
        %s179 = scalar_select %p178, %s21, 1
        %s180 = smul.addr %s179, 2
        %s181 = smul.addr %s180, 4
        %s182 = scalar_lea.vmem %s0, %s181
        %v183 = vld [vmem:[%s2] sm:$0xff]
        %v184 = vld [vmem:[%s1] sm:$0xff]
        %s185 = scalar_lea.vmem %s1, 8
        %v186 = vld [vmem:[%s185] sm:$0xff]
        %s187 = scalar_lea.vmem %s1, 16
        %v188 = vld [vmem:[%s187] sm:$0xff]
        %v189 = vld [vmem:[%s182] sm:$0xf]
        %v190 = vld [vmem:[%s182] sm:$0xff]
        %v192 = vcombine.high %v190, %v190
        %193 = vrot.lane.b32.xlu0 %v190, 126
        %v194 = vpop.permute.xlu0 %193
        %195 = vrot.lane.b32.xlu0 %v192, 126
        %v196 = vpop.permute.xlu0 %195
        %vm197 = vcmask 1031168
        %v198 = vsel %vm197, %v194, %v196
        %vm199 = vcmask 31744
        %v201 = vsel %vm199, %v186, 0
        %vm203 = vcmask 1043456
        %v204 = vsel %vm203, %v198, 0
        %206 = vmatprep.subr.mxu0 0.0
        %207 = vmatpush1.msra.mxu0 %v204
        %208 = vmatprep.subr.mxu0 0.0
        %209 = vmatpush1.msra.mxu0 0.0
        %210 = vmatprep.subr.mxu0 0.0
        %211 = vmatpush1.msra.mxu0 0.0
        %212 = vmatprep.subr.mxu0 0.0
        %213 = vmatpush1.msra.mxu0 0.0
        %214 = vmatprep.subr.mxu0 0.0
        %215 = vmatpush1.msra.mxu0 0.0
        %216 = vmatprep.subr.mxu0 0.0
        %217 = vmatpush1.msra.mxu0 0.0
        %218 = vmatprep.subr.mxu0 0.0
        %219 = vmatpush1.msra.mxu0 0.0
        %220 = vmatprep.subr.mxu0 0.0
        %221 = vmatpush1.msra.mxu0 0.0
        %222 = vmatprep.subr.mxu0 0.0
        %223 = vmatpush1.msra.mxu0 0.0
        %224 = vmatprep.subr.mxu0 0.0
        %225 = vmatpush1.msra.mxu0 0.0
        %226 = vmatprep.subr.mxu0 0.0
        %227 = vmatpush1.msra.mxu0 0.0
        %228 = vmatprep.subr.mxu0 0.0
        %229 = vmatpush1.msra.mxu0 0.0
        %230 = vmatprep.subr.mxu0 0.0
        %231 = vmatpush1.msra.mxu0 0.0
        %232 = vmatprep.subr.mxu0 0.0
        %233 = vmatpush1.msra.mxu0 0.0
        %234 = vmatprep.subr.mxu0 0.0
        %235 = vmatpush1.msra.mxu0 0.0
        %236 = vmatprep.subr.mxu0 0.0
        %237 = vmatpush1.msra.mxu0 0.0
        %238 = vmatprep.subr.mxu0 0.0
        %239 = vmatpush1.msra.mxu0 0.0
        %240 = vmatprep.subr.mxu0 0.0
        %241 = vmatpush1.msra.mxu0 0.0
        %242 = vmatprep.subr.mxu0 0.0
        %243 = vmatpush1.msra.mxu0 0.0
        %244 = vmatprep.subr.mxu0 0.0
        %245 = vmatpush1.msra.mxu0 0.0
        %246 = vmatprep.subr.mxu0 0.0
        %247 = vmatpush1.msra.mxu0 0.0
        %248 = vmatprep.subr.mxu0 0.0
        %249 = vmatpush1.msra.mxu0 0.0
        %250 = vmatprep.subr.mxu0 0.0
        %251 = vmatpush1.msra.mxu0 0.0
        %252 = vmatprep.subr.mxu0 0.0
        %253 = vmatpush1.msra.mxu0 0.0
        %254 = vmatprep.subr.mxu0 0.0
        %255 = vmatpush1.msra.mxu0 0.0
        %256 = vmatprep.subr.mxu0 0.0
        %257 = vmatpush1.msra.mxu0 0.0
        %258 = vmatprep.subr.mxu0 0.0
        %259 = vmatpush1.msra.mxu0 0.0
        %260 = vmatprep.subr.mxu0 0.0
        %261 = vmatpush1.msra.mxu0 0.0
        %262 = vmatprep.subr.mxu0 0.0
        %263 = vmatpush1.msra.mxu0 0.0
        %264 = vmatprep.subr.mxu0 0.0
        %265 = vmatpush1.msra.mxu0 0.0
        %266 = vmatprep.subr.mxu0 0.0
        %267 = vmatpush1.msra.mxu0 0.0
        %268 = vmatprep.subr.mxu0 0.0
        %269 = vmatpush1.msra.mxu0 0.0
        %270 = vmatprep.mubr.f32.mxu0 0.0
        %271 = vmatmul.mubr.f32.gmra.mrb[0].mxu0 %v201
        %v272 = vpop.f32.mrb[0].mxu0
        %v273 = vadd.f32 0.0, %v272
        %v274 = vpop.f32.mrb[0].mxu0
        %275 = vdwg.mxu0
        %v277 = vsel %vm199, %v184, 0
        %v280 = vsel %vm203, %v189, 0
        %282 = vmatprep.subr.mxu0 0.0
        %283 = vmatpush1.msra.mxu0 %v280
        %284 = vmatprep.subr.mxu0 0.0
        %285 = vmatpush1.msra.mxu0 0.0
        %286 = vmatprep.subr.mxu0 0.0
        %287 = vmatpush1.msra.mxu0 0.0
        %288 = vmatprep.subr.mxu0 0.0
        %289 = vmatpush1.msra.mxu0 0.0
        %290 = vmatprep.subr.mxu0 0.0
        %291 = vmatpush1.msra.mxu0 0.0
        %292 = vmatprep.subr.mxu0 0.0
        %293 = vmatpush1.msra.mxu0 0.0
        %294 = vmatprep.subr.mxu0 0.0
        %295 = vmatpush1.msra.mxu0 0.0
        %296 = vmatprep.subr.mxu0 0.0
        %297 = vmatpush1.msra.mxu0 0.0
        %298 = vmatprep.subr.mxu0 0.0
        %299 = vmatpush1.msra.mxu0 0.0
        %300 = vmatprep.subr.mxu0 0.0
        %301 = vmatpush1.msra.mxu0 0.0
        %302 = vmatprep.subr.mxu0 0.0
        %303 = vmatpush1.msra.mxu0 0.0
        %304 = vmatprep.subr.mxu0 0.0
        %305 = vmatpush1.msra.mxu0 0.0
        %306 = vmatprep.subr.mxu0 0.0
        %307 = vmatpush1.msra.mxu0 0.0
        %308 = vmatprep.subr.mxu0 0.0
        %309 = vmatpush1.msra.mxu0 0.0
        %310 = vmatprep.subr.mxu0 0.0
        %311 = vmatpush1.msra.mxu0 0.0
        %312 = vmatprep.subr.mxu0 0.0
        %313 = vmatpush1.msra.mxu0 0.0
        %314 = vmatprep.subr.mxu0 0.0
        %315 = vmatpush1.msra.mxu0 0.0
        %316 = vmatprep.subr.mxu0 0.0
        %317 = vmatpush1.msra.mxu0 0.0
        %318 = vmatprep.subr.mxu0 0.0
        %319 = vmatpush1.msra.mxu0 0.0
        %320 = vmatprep.subr.mxu0 0.0
        %321 = vmatpush1.msra.mxu0 0.0
        %322 = vmatprep.subr.mxu0 0.0
        %323 = vmatpush1.msra.mxu0 0.0
        %324 = vmatprep.subr.mxu0 0.0
        %325 = vmatpush1.msra.mxu0 0.0
        %326 = vmatprep.subr.mxu0 0.0
        %327 = vmatpush1.msra.mxu0 0.0
        %328 = vmatprep.subr.mxu0 0.0
        %329 = vmatpush1.msra.mxu0 0.0
        %330 = vmatprep.subr.mxu0 0.0
        %331 = vmatpush1.msra.mxu0 0.0
        %332 = vmatprep.subr.mxu0 0.0
        %333 = vmatpush1.msra.mxu0 0.0
        %334 = vmatprep.subr.mxu0 0.0
        %335 = vmatpush1.msra.mxu0 0.0
        %336 = vmatprep.subr.mxu0 0.0
        %337 = vmatpush1.msra.mxu0 0.0
        %338 = vmatprep.subr.mxu0 0.0
        %339 = vmatpush1.msra.mxu0 0.0
        %340 = vmatprep.subr.mxu0 0.0
        %341 = vmatpush1.msra.mxu0 0.0
        %342 = vmatprep.subr.mxu0 0.0
        %343 = vmatpush1.msra.mxu0 0.0
        %344 = vmatprep.subr.mxu0 0.0
        %345 = vmatpush1.msra.mxu0 0.0
        %346 = vmatprep.mubr.f32.mxu0 0.0
        %347 = vmatmul.mubr.f32.gmra.mrb[0].mxu0 %v277
        %v348 = vpop.f32.mrb[0].mxu0
        %v349 = vadd.f32 %v273, %v348
        %v350 = vpop.f32.mrb[0].mxu0
        %351 = vdwg.mxu0
        %v352 = vld [vmem:[%s182] sm:$0xff]
        %v354 = vcombine.high %v352, %v352
        %355 = vrot.lane.b32.xlu0 %v352, 124
        %v356 = vpop.permute.xlu0 %355
        %357 = vrot.lane.b32.xlu0 %v354, 124
        %v358 = vpop.permute.xlu0 %357
        %vm359 = vcmask 1014784
        %v360 = vsel %vm359, %v356, %v358
        %v362 = vsel %vm199, %v188, 0
        %v364 = vsel %vm203, %v360, 0
        %366 = vmatprep.subr.mxu0 0.0
        %367 = vmatpush1.msra.mxu0 %v364
        %368 = vmatprep.subr.mxu0 0.0
        %369 = vmatpush1.msra.mxu0 0.0
        %370 = vmatprep.subr.mxu0 0.0
        %371 = vmatpush1.msra.mxu0 0.0
        %372 = vmatprep.subr.mxu0 0.0
        %373 = vmatpush1.msra.mxu0 0.0
        %374 = vmatprep.subr.mxu0 0.0
        %375 = vmatpush1.msra.mxu0 0.0
        %376 = vmatprep.subr.mxu0 0.0
        %377 = vmatpush1.msra.mxu0 0.0
        %378 = vmatprep.subr.mxu0 0.0
        %379 = vmatpush1.msra.mxu0 0.0
        %380 = vmatprep.subr.mxu0 0.0
        %381 = vmatpush1.msra.mxu0 0.0
        %382 = vmatprep.subr.mxu0 0.0
        %383 = vmatpush1.msra.mxu0 0.0
        %384 = vmatprep.subr.mxu0 0.0
        %385 = vmatpush1.msra.mxu0 0.0
        %386 = vmatprep.subr.mxu0 0.0
        %387 = vmatpush1.msra.mxu0 0.0
        %388 = vmatprep.subr.mxu0 0.0
        %389 = vmatpush1.msra.mxu0 0.0
        %390 = vmatprep.subr.mxu0 0.0
        %391 = vmatpush1.msra.mxu0 0.0
        %392 = vmatprep.subr.mxu0 0.0
        %393 = vmatpush1.msra.mxu0 0.0
        %394 = vmatprep.subr.mxu0 0.0
        %395 = vmatpush1.msra.mxu0 0.0
        %396 = vmatprep.subr.mxu0 0.0
        %397 = vmatpush1.msra.mxu0 0.0
        %398 = vmatprep.subr.mxu0 0.0
        %399 = vmatpush1.msra.mxu0 0.0
        %400 = vmatprep.subr.mxu0 0.0
        %401 = vmatpush1.msra.mxu0 0.0
        %402 = vmatprep.subr.mxu0 0.0
        %403 = vmatpush1.msra.mxu0 0.0
        %404 = vmatprep.subr.mxu0 0.0
        %405 = vmatpush1.msra.mxu0 0.0
        %406 = vmatprep.subr.mxu0 0.0
        %407 = vmatpush1.msra.mxu0 0.0
        %408 = vmatprep.subr.mxu0 0.0
        %409 = vmatpush1.msra.mxu0 0.0
        %410 = vmatprep.subr.mxu0 0.0
        %411 = vmatpush1.msra.mxu0 0.0
        %412 = vmatprep.subr.mxu0 0.0
        %413 = vmatpush1.msra.mxu0 0.0
        %414 = vmatprep.subr.mxu0 0.0
        %415 = vmatpush1.msra.mxu0 0.0
        %416 = vmatprep.subr.mxu0 0.0
        %417 = vmatpush1.msra.mxu0 0.0
        %418 = vmatprep.subr.mxu0 0.0
        %419 = vmatpush1.msra.mxu0 0.0
        %420 = vmatprep.subr.mxu0 0.0
        %421 = vmatpush1.msra.mxu0 0.0
        %422 = vmatprep.subr.mxu0 0.0
        %423 = vmatpush1.msra.mxu0 0.0
        %424 = vmatprep.subr.mxu0 0.0
        %425 = vmatpush1.msra.mxu0 0.0
        %426 = vmatprep.subr.mxu0 0.0
        %427 = vmatpush1.msra.mxu0 0.0
        %428 = vmatprep.subr.mxu0 0.0
        %429 = vmatpush1.msra.mxu0 0.0
        %430 = vmatprep.mubr.f32.mxu0 0.0
        %431 = vmatmul.mubr.f32.gmra.mrb[0].mxu0 %v362
        %v432 = vpop.f32.mrb[0].mxu0
        %v433 = vadd.f32 0.0, %v432
        %v434 = vpop.f32.mrb[0].mxu0
        %435 = vdwg.mxu0
        %v436 = vadd.f32 %v349, %v433
        %438 = vset.pattern.permute.xlu0 0
        %439 = vperm.xlu0 %438, %v183
        %v440 = vpop.permute.xlu0 %439
        %v442 = vadd.f32 %v436, %v440
        %v443 = vmax.f32 %v442, 0.0
        %444 = vst [vmem:[%s177] sm:$0xff] %v443
        %s445 = sand.u32 %s107, 1
        %s446 = scalar_lea.sflag [#allocation3], %s445
        %s447 = sand.u32 %s107, 1
        %s448 = smul.addr %s447, 8
        %s449 = scalar_lea.vmem [#allocation2], %s448
        // Predicated region
        $region33: #{tpu_custom_call.1} parent=31 // pred_check
          %p450 = pneg %p117
        $region34: #{tpu_custom_call.1} parent=31 // pred_check_branch
          %452 = sbr.rel (%p450) target = $region36
        $region35: #{tpu_custom_call.1} parent=31 // pred_region
          %s454 = ssub.s32 128, 128
          %455 = vsyncadd %s446, %s454
          %s456 = sadd.s32 %s22, %s21
          %s457 = smul.addr %s456, 128
          %s458 = scalar_lea.hbm %s3, %s457
          %s460 = sshll.u32 %s449, 4
          %s461 = int_to_ptr.vmem [resolvable:$true] %s460
          %463 = dma.vmem_to_hbm [thread:$0]  %s461, 128, %s458, %s446
        $region36: #{tpu_custom_call.1} parent=31 // pred_fallthru
          _
      $region32: #{tpu_custom_call.1} parent=5 // pred_fallthru
        _
      %p464 = scmp.le.s32.totalorder 2, %s12
      // Predicated region
      $region37: #{tpu_custom_call.1} parent=5 // pred_check
        %p465 = pneg %p464
      $region38: #{tpu_custom_call.1} parent=5 // pred_check_branch
        %467 = sbr.rel (%p465) target = $region40
      $region39: #{tpu_custom_call.1} parent=5 // pred_region
        %s468 = ssub.s32 %s12, 2
        // Predicated region
        $region41: #{tpu_custom_call.1} parent=39 // pred_check
          %p469 = pneg %p123
        $region42: #{tpu_custom_call.1} parent=39 // pred_check_branch
          %471 = sbr.rel (%p469) target = $region44
        $region43: #{tpu_custom_call.1} parent=39 // pred_region
          %s472 = sand.u32 %s108, 1
          %s473 = scalar_lea.sflag [#allocation3], %s472
          %s474 = sand.u32 %s108, 1
          %s475 = smul.addr %s474, 8
          %s476 = scalar_lea.vmem [#allocation2], %s475
          %477 = dma.done %s473, 128
        $region44: #{tpu_custom_call.1} parent=39 // pred_fallthru
          _
      $region40: #{tpu_custom_call.1} parent=5 // pred_fallthru
        _
    $region6: #{tpu_custom_call.1} parent=1 // loop_footer
      %s16 = sadd.s32 1, %s12
    $region7: #{tpu_custom_call.1} parent=1 // loop_footer_branch
      %11 = sbr.rel target = $region3
    $region8: #{tpu_custom_call.1} parent=1 // loop_exit
      _
    %478 = vsyncpa [#allocation3], 1
    %s479 = scalar_lea.sflag [#allocation3], 1
    %480 = vsyncpa %s479, 1

</llo_original>
